<compile_context>
chip_gen: v6e
topology: v6e:2x2x1
jax: 0.10.0
libtpu: 0.0.40
codegen_flags: <defaults>
</compile_context>

<pallas_src>
import functools
import math

import jax
import jax.numpy as jnp
from jax import lax
from jax.experimental import pallas as pl
from jax.experimental.pallas import tpu as pltpu


LANES = 128
MAX_ROW_TILE = 8192                 # 8192 * 128 * 4B = 4 MiB per f32 input tile
VMEM_LIMIT_BYTES = 32 * 1024 * 1024 # 2 inputs x 2 buffers x 4 MiB = 16 MiB + slack


def _num_tensorcores() -> int:
    """Best-effort TensorCore count (2 on v7x, 1 on v5e/v6e).

    Falls back to 2: a 2-way "parallel" split is a harmless small sequential
    outer loop on single-TC chips (duplicate/edge blocks are fully masked).
    """
    try:
        info = pltpu.get_tpu_info()
    except Exception:
        return 2
    for name in ("num_cores", "num_tensorcores", "tensorcores_per_chip",
                 "cores_per_chip", "core_count"):
        v = getattr(info, name, None)
        if v:
            try:
                return max(1, int(v))
            except (TypeError, ValueError):
                pass
    return 2


def _exp_mse_partial_kernel(out_ref, tgt_ref, psum_ref, *,
                            t_eff, alpha_mul, clamp_min_eff, clamp_max_eff,
                            row_tile, blocks_per_split, n_blocks, valid_rows,
                            needs_mask):
    c = pl.program_id(0)   # TensorCore split (parallel)
    i = pl.program_id(1)   # row-block within split (arbitrary / sequential)

    @pl.when(i == 0)
    def _():
        psum_ref[...] = jnp.zeros_like(psum_ref)

    # Cast in-kernel; inputs are streamed from HBM in their original dtype.
    o = out_ref[...].astype(jnp.float32)
    tg = tgt_ref[...].astype(jnp.float32)

    delta = jnp.clip(o - t_eff, clamp_min_eff, clamp_max_eff)
    diff = o - tg
    contrib = jnp.exp(delta) * (diff * diff)
    if alpha_mul is not None:      # only when alpha could not be folded (alpha <= 0)
        contrib = alpha_mul * contrib

    def _accumulate(x):
        psum_ref[...] += jnp.sum(x, axis=0, keepdims=True).reshape(1, 1, LANES)

    if not needs_mask:
        # Every block is full and unique: unmasked fast path (trace-time skip).
        _accumulate(contrib)
    else:
        logical_block = c * blocks_per_split + i
        is_edge = logical_block >= (n_blocks - 1)

        @pl.when(jnp.logical_not(is_edge))
        def _():
            # Interior blocks are always fully valid -> no mask needed.
            _accumulate(contrib)

        @pl.when(is_edge)
        def _():
            # Rows still valid within this logical block (<= 0 for the clamped
            # duplicate blocks of a ragged split -> fully masked).  Scalar
            # bound computed on the scalar unit; local sublane iota only.
            bound = valid_rows - logical_block * row_tile
            row_iota = lax.broadcasted_iota(jnp.int32, (row_tile, LANES), 0)
            # Select (not multiply): inf/NaN from garbage edge-block reads is
            # neutralized exactly.
            _accumulate(jnp.where(row_iota < bound, contrib, 0.0))


def exp_mse_loss(output, target, *, t, alpha=6.0, clamp_min=-1.8, clamp_max=1.5,
                 max_rows=MAX_ROW_TILE):
    assert output.shape == target.shape
    n_true = output.size

    o_flat = output.reshape(-1)
    tg_flat = target.reshape(-1)

    # Pad only up to the next multiple of 128 (zeros contribute exactly 0).
    # Lane-aligned element counts take a zero-copy pure-reshape path.
    # TODO(synk): the unaligned path still materializes one padded copy of each
    # input in HBM; an element-masked 1-D edge block would remove that pass.
    n_pad = (-n_true) % LANES
    if n_pad:
        o_flat = jnp.pad(o_flat, (0, n_pad))
        tg_flat = jnp.pad(tg_flat, (0, n_pad))
    rows = (n_true + n_pad) // LANES

    o2d = o_flat.reshape(rows, LANES)
    tg2d = tg_flat.reshape(rows, LANES)

    if rows <= max_rows:
        row_tile = rows            # single block == full array (always legal)
    else:
        assert max_rows % 8 == 0
        row_tile = max_rows        # multiple of 8; ragged tail masked in-kernel
    n_blocks = pl.cdiv(rows, row_tile)

    # Split row blocks across TensorCores (2 on v7x); single split otherwise.
    n_split = min(_num_tensorcores(), n_blocks) if n_blocks >= 2 else 1
    n_split = max(n_split, 1)
    blocks_per_split = pl.cdiv(n_blocks, n_split)
    even_split = (n_split * blocks_per_split == n_blocks)

    if even_split:
        def in_map(c, i):
            return (c * blocks_per_split + i, 0)
    else:
        # Ragged split: clamp the block index; the duplicated block is fully
        # masked inside the kernel via the logical block index.
        last_block = n_blocks - 1

        def in_map(c, i):
            return (jnp.minimum(c * blocks_per_split + i, last_block), 0)

    # Masking only needed when the last block is partial or the split duplicates
    # a block; otherwise the mask is removed at trace time.
    needs_mask = (rows % row_tile != 0) or (not even_split)

    # Fold alpha into the exponent (exact for alpha > 0):
    #   alpha * exp(clamp(o - t, lo, hi))
    #     == exp(clamp(o - (t - ln a), lo + ln a, hi + ln a))
    if alpha > 0:
        ln_a = math.log(float(alpha))
        t_eff = float(t) - ln_a
        cmin_eff = float(clamp_min) + ln_a
        cmax_eff = float(clamp_max) + ln_a
        alpha_mul = None
    else:
        t_eff, cmin_eff, cmax_eff = float(t), float(clamp_min), float(clamp_max)
        alpha_mul = float(alpha)

    kernel = functools.partial(
        _exp_mse_partial_kernel,
        t_eff=t_eff, alpha_mul=alpha_mul,
        clamp_min_eff=cmin_eff, clamp_max_eff=cmax_eff,
        row_tile=row_tile, blocks_per_split=blocks_per_split,
        n_blocks=n_blocks, valid_rows=rows, needs_mask=needs_mask)

    partials = pl.pallas_call(
        kernel,
        out_shape=jax.ShapeDtypeStruct((n_split, 1, LANES), jnp.float32),
        grid_spec=pltpu.PrefetchScalarGridSpec(
            num_scalar_prefetch=0,
            grid=(n_split, blocks_per_split),
            in_specs=[
                pl.BlockSpec((row_tile, LANES), in_map),
                pl.BlockSpec((row_tile, LANES), in_map),
            ],
            out_specs=pl.BlockSpec((1, 1, LANES), lambda c, i: (c, 0, 0)),
        ),
        compiler_params=pltpu.CompilerParams(
            dimension_semantics=("parallel", "arbitrary"),
            vmem_limit_bytes=VMEM_LIMIT_BYTES),
    )(o2d, tg2d)

    # Scalar glue: combine lane-wise partials, mean + sqrt.
    total = jnp.sum(partials)
    return jnp.sqrt(total / jnp.float32(n_true))


def exp_mse_loss_ref(output, target, *, t, alpha=6.0, clamp_min=-1.8, clamp_max=1.5):
    output = output.astype(jnp.float32)
    target = target.astype(jnp.float32)
    delta = jnp.clip(output - t, clamp_min, clamp_max)
    return jnp.sqrt(jnp.mean(alpha * jnp.exp(delta) * (output - target) ** 2))


if __name__ == "__main__":
    key = jax.random.PRNGKey(0)
    t_param = 0.5  # constructor arg of the module
    k1, k2, k3, k4, k5, k6 = jax.random.split(key, 6)

    # NCHW-like small shape, lane-aligned (zero-copy fast path, single block).
    shape = (2, 4, 16, 16)
    output = jax.random.normal(k1, shape, dtype=jnp.float32)
    target = jax.random.normal(k2, shape, dtype=jnp.float32)
    loss = jax.block_until_ready(exp_mse_loss(output, target, t=t_param))
    ref = exp_mse_loss_ref(output, target, t=t_param)
    assert jnp.allclose(loss, ref, rtol=1e-5, atol=1e-6), (loss, ref)

    # Non-lane-aligned shape (1155 elements) to exercise lane padding.
    shape2 = (3, 5, 7, 11)
    output2 = jax.random.normal(k3, shape2, dtype=jnp.float32)
    target2 = jax.random.normal(k4, shape2, dtype=jnp.float32)
    loss2 = jax.block_until_ready(exp_mse_loss(output2, target2, t=t_param))
    ref2 = exp_mse_loss_ref(output2, target2, t=t_param)
    assert jnp.allclose(loss2, ref2, rtol=1e-5, atol=1e-6), (loss2, ref2)

    # Small row-tile override: exercises the multi-block grid, the partial
    # edge block, the ragged 2-way split, and the predicated mask path.
    shape3 = (5, 503)  # 2515 elements -> 20 rows of 128 with row_tile=8
    output3 = jax.random.normal(k5, shape3, dtype=jnp.float32)
    target3 = jax.random.normal(k6, shape3, dtype=jnp.float32)
    loss3 = jax.block_until_ready(exp_mse_loss(output3, target3, t=t_param, max_rows=8))
    ref3 = exp_mse_loss_ref(output3, target3, t=t_param)
    assert jnp.allclose(loss3, ref3, rtol=1e-5, atol=1e-6), (loss3, ref3)

    print("KERNEL_OK")
</pallas_src>

<mosaic_0001>
module attributes {stable_mosaic.version = 11 : i64} {
  func.func @_exp_mse_partial_kernel(%arg0: i32, %arg1: i32, %arg2: memref<16x128xf32, #tpu.memory_space<vmem>>, %arg3: memref<16x128xf32, #tpu.memory_space<vmem>>, %arg4: memref<1x1x128xf32, #tpu.memory_space<vmem>>) attributes {dimension_semantics = [#tpu.dimension_semantics<parallel>, #tpu.dimension_semantics<arbitrary>], iteration_bounds = array<i64: 1, 1>, scalar_prefetch = 0 : i64, scratch_operands = 0 : i64, tpu.core_type = #tpu.core_type<tc>, window_params = [{transform_indices = @transform_0, window_bounds = array<i64: 16, 128>}, {transform_indices = @transform_1, window_bounds = array<i64: 16, 128>}, {transform_indices = @transform_2, window_bounds = array<i64: 1, 1, 128>}]} {
    %c0_i32 = arith.constant 0 : i32
    %0 = arith.cmpi eq, %arg1, %c0_i32 : i32
    %1 = arith.extui %0 : i1 to i32
    %c0_i32_0 = arith.constant 0 : i32
    %2 = arith.cmpi ne, %1, %c0_i32_0 : i32
    scf.if %2 {
      %cst_13 = arith.constant 0.000000e+00 : f32
      %21 = vector.broadcast %cst_13 : f32 to vector<1x1x128xf32>
      %c0_14 = arith.constant 0 : index
      %c0_15 = arith.constant 0 : index
      %c0_16 = arith.constant 0 : index
      %22 = vector.load %arg4[%c0_14, %c0_15, %c0_16] : memref<1x1x128xf32, #tpu.memory_space<vmem>>, vector<1x1x128xf32>
      tpu.vector_store %arg4[%c0_14, %c0_15, %c0_16], %21 {strides = array<i32>} : memref<1x1x128xf32, #tpu.memory_space<vmem>>, vector<1x1x128xf32>,
    } else {
    }
    %c0 = arith.constant 0 : index
    %c0_1 = arith.constant 0 : index
    %3 = vector.load %arg2[%c0, %c0_1] : memref<16x128xf32, #tpu.memory_space<vmem>>, vector<16x128xf32>
    %c0_2 = arith.constant 0 : index
    %c0_3 = arith.constant 0 : index
    %4 = vector.load %arg3[%c0_2, %c0_3] : memref<16x128xf32, #tpu.memory_space<vmem>>, vector<16x128xf32>
    %cst = arith.constant -1.29175949 : f32
    %5 = vector.broadcast %cst : f32 to vector<16x128xf32>
    %6 = arith.subf %3, %5 : vector<16x128xf32>
    %cst_4 = arith.constant -0.0082405312 : f32
    %cst_5 = arith.constant 3.29175949 : f32
    %7 = vector.broadcast %cst_4 : f32 to vector<16x128xf32>
    %8 = arith.maximumf %7, %6 : vector<16x128xf32>
    %9 = vector.broadcast %cst_5 : f32 to vector<16x128xf32>
    %10 = arith.minimumf %9, %8 : vector<16x128xf32>
    %11 = arith.subf %3, %4 : vector<16x128xf32>
    %12 = math.exp %10 : vector<16x128xf32>
    %13 = arith.mulf %11, %11 : vector<16x128xf32>
    %14 = arith.mulf %12, %13 : vector<16x128xf32>
    %c0_6 = arith.constant 0 : index
    %c0_7 = arith.constant 0 : index
    %c0_8 = arith.constant 0 : index
    %15 = vector.load %arg4[%c0_6, %c0_7, %c0_8] : memref<1x1x128xf32, #tpu.memory_space<vmem>>, vector<1x1x128xf32>
    %cst_9 = arith.constant dense<0.000000e+00> : vector<128xf32>
    %16 = vector.multi_reduction <add>, %14, %cst_9 [0] : vector<16x128xf32> to vector<128xf32>
    %17 = vector.shape_cast %16 : vector<128xf32> to vector<1x128xf32>
    %18 = vector.shape_cast %17 : vector<1x128xf32> to vector<1x1x128xf32>
    %19 = arith.addf %15, %18 : vector<1x1x128xf32>
    %c0_10 = arith.constant 0 : index
    %c0_11 = arith.constant 0 : index
    %c0_12 = arith.constant 0 : index
    %20 = vector.load %arg4[%c0_10, %c0_11, %c0_12] : memref<1x1x128xf32, #tpu.memory_space<vmem>>, vector<1x1x128xf32>
    tpu.vector_store %arg4[%c0_10, %c0_11, %c0_12], %19 {strides = array<i32>} : memref<1x1x128xf32, #tpu.memory_space<vmem>>, vector<1x1x128xf32>,
    return
  }
  func.func @transform_0(%arg0: i32, %arg1: i32) -> (i32, i32) {
    %c1_i32 = arith.constant 1 : i32
    %0 = arith.muli %arg0, %c1_i32 : i32
    %1 = arith.addi %0, %arg1 : i32
    %c0_i32 = arith.constant 0 : i32
    %c0_i32_0 = arith.constant 0 : i32
    return %1, %c0_i32 : i32, i32
  }
  func.func @transform_1(%arg0: i32, %arg1: i32) -> (i32, i32) {
    %c1_i32 = arith.constant 1 : i32
    %0 = arith.muli %arg0, %c1_i32 : i32
    %1 = arith.addi %0, %arg1 : i32
    %c0_i32 = arith.constant 0 : i32
    %c0_i32_0 = arith.constant 0 : i32
    return %1, %c0_i32 : i32, i32
  }
  func.func @transform_2(%arg0: i32, %arg1: i32) -> (i32, i32, i32) {
    %c0_i32 = arith.constant 0 : i32
    %c0_i32_0 = arith.constant 0 : i32
    %c0_i32_1 = arith.constant 0 : i32
    return %arg0, %c0_i32, %c0_i32_0 : i32, i32, i32
  }
}

</mosaic_0001>

<llo_original>
// kernel: tpu_custom_call.1
$region0: #{tpu_custom_call.1}
  #allocation0 [shape = 'u32[]', space=smem, size = 0x4, offset = 0x4, fixed_abs, tag = 'smem constant byte address 0x4 - core index']
  #allocation1 [shape = 'u32[144,128]{1,0:T(1,128)}', space=vmem, size = 0x12000, scoped, tag = 'internal scratch']
  %s0 = inlined_call_operand.hbm [shape: f32[16,128], index: 0, kind: input, shape index: {}]
  %s1 = inlined_call_operand.hbm [shape: f32[16,128], index: 1, kind: input, shape index: {}]
  %s2 = inlined_call_operand.hbm [shape: f32[1,1,128], index: 2, kind: output, shape index: {}]
  %s3 = sld [smem:[#allocation0]]
  $region30: #{tpu_custom_call.1} parent=0
    _
  %s5 = ssub.s32 1, %s3
  %s6 = scalar_select 0, %s5, %s3
  $region1: #{tpu_custom_call.1} parent=0
    #allocation2 [shape = 'u8[8192]{0}', space=vmem, size = 0x2000, scoped, tag = 'input window, operand 0, single buffered']
    #allocation3 [shape = 's32[1]{0}', space=sflag, size = 0x4, scoped, tag = 'scoped memory for tpu_custom_call.1']
    #allocation4 [shape = 's32[1]{0}', space=sflag, size = 0x4, scoped, tag = 'scoped memory for tpu_custom_call.1']
    #allocation5 [shape = 'u8[8192]{0}', space=vmem, size = 0x2000, scoped, tag = 'input window, operand 1, single buffered']
    #allocation6 [shape = 's32[1]{0}', space=sflag, size = 0x4, scoped, tag = 'scoped memory for tpu_custom_call.1']
    #allocation7 [shape = 'u8[512]{0}', space=vmem, size = 0x400, scoped, tag = 'output window, operand 0, single buffered']
    %7 = vsyncpa [#allocation3], 0
    %8 = vsyncpa [#allocation6], 0
    %9 = vsyncpa [#allocation4], 0
    // Predicated region
    $region2: #{tpu_custom_call.1} parent=1 // pred_check
      _
    $region3: #{tpu_custom_call.1} parent=1 // pred_check_branch
      %11 = sbr.rel (0) target = $region5
    $region4: #{tpu_custom_call.1} parent=1 // pred_region
      %s12 = sadd.s32 0, 0
      %s13 = smul.u32 2, %s12
      %s15 = ssub.s32 256, 256
      %16 = vsyncadd [#allocation3], %s15
      %s17 = smul.addr %s13, 128
      %s18 = scalar_lea.hbm %s0, %s17
      %s19 = sshll.u32 [#allocation2], 4
      %s20 = int_to_ptr.vmem [resolvable:$true] %s19
      %25 = dma.hbm_to_vmem [thread:$0]  %s18, 256, %s20, [#allocation3], 128, 128, 8
    $region5: #{tpu_custom_call.1} parent=1 // pred_fallthru
      _
    // Predicated region
    $region6: #{tpu_custom_call.1} parent=1 // pred_check
      _
    $region7: #{tpu_custom_call.1} parent=1 // pred_check_branch
      %27 = sbr.rel (0) target = $region9
    $region8: #{tpu_custom_call.1} parent=1 // pred_region
      %s28 = sadd.s32 0, 0
      %s29 = smul.u32 2, %s28
      %s31 = ssub.s32 256, 256
      %32 = vsyncadd [#allocation6], %s31
      %s33 = smul.addr %s29, 128
      %s34 = scalar_lea.hbm %s1, %s33
      %s35 = sshll.u32 [#allocation5], 4
      %s36 = int_to_ptr.vmem [resolvable:$true] %s35
      %41 = dma.hbm_to_vmem [thread:$0]  %s34, 256, %s36, [#allocation6], 128, 128, 8
    $region9: #{tpu_custom_call.1} parent=1 // pred_fallthru
      _
    // Predicated region
    $region10: #{tpu_custom_call.1} parent=1 // pred_check
      _
    $region11: #{tpu_custom_call.1} parent=1 // pred_check_branch
      %43 = sbr.rel (0) target = $region13
    $region12: #{tpu_custom_call.1} parent=1 // pred_region
      %44 = dma.done [#allocation3], 256
    $region13: #{tpu_custom_call.1} parent=1 // pred_fallthru
      _
    // Predicated region
    $region14: #{tpu_custom_call.1} parent=1 // pred_check
      _
    $region15: #{tpu_custom_call.1} parent=1 // pred_check_branch
      %46 = sbr.rel (0) target = $region17
    $region16: #{tpu_custom_call.1} parent=1 // pred_region
      %47 = dma.done [#allocation6], 256
    $region17: #{tpu_custom_call.1} parent=1 // pred_fallthru
      _
    %s48 = sadd.s32 0, 0
    %s49 = smul.u32 2, %s48
    %s50 = sadd.s32 0, 0
    %s51 = smul.u32 2, %s50
    %p52 = scmp.eq.s32.totalorder 0, 0
    // Predicated region
    $region18: #{tpu_custom_call.1} parent=1 // pred_check
      %p53 = pneg %p52
    $region19: #{tpu_custom_call.1} parent=1 // pred_check_branch
      %55 = sbr.rel (%p53) target = $region21
    $region20: #{tpu_custom_call.1} parent=1 // pred_region
      %56 = vst [vmem:[#allocation7] sm:$0x1] 0.0
    $region21: #{tpu_custom_call.1} parent=1 // pred_fallthru
      _
    %v57 = vld [vmem:[#allocation2] sm:$0xff]
    %v58 = vld [vmem:[#allocation2 + $0x8] sm:$0xff]
    %v59 = vld [vmem:[#allocation5] sm:$0xff]
    %v60 = vld [vmem:[#allocation5 + $0x8] sm:$0xff]
    %v61 = vsub.f32 %v57, -1.2917595
    %v62 = vsub.f32 %v58, -1.2917595
    %v63 = vmax.f32 %v61, -0.008240531
    %v64 = vmax.f32 %v62, -0.008240531
    %v65 = vmin.f32 %v63, 3.2917595
    %v66 = vmin.f32 %v64, 3.2917595
    %v67 = vsub.f32 %v57, %v59
    %v68 = vsub.f32 %v58, %v60
    %v69 = vmul.f32 %v65, 1.442695
    %v70 = vpow.pop %v69
    %v71 = vmul.f32 %v66, 1.442695
    %v72 = vpow.pop %v71
    %v73 = vmul.f32 %v67, %v67
    %v74 = vmul.f32 %v68, %v68
    %v75 = vmul.f32 %v70, %v73
    %v76 = vmul.f32 %v72, %v74
    %v77 = vld [vmem:[#allocation7] sm:$0x1]
    %v78 = vadd.f32 %v75, %v76
    %v79 = vrot.slane %v78, 4
    %v80 = vadd.f32 %v78, %v79
    %v81 = vrot.slane %v80, 2
    %v82 = vadd.f32 %v80, %v81
    %v83 = vrot.slane %v82, 1
    %v84 = vadd.f32 %v82, %v83
    %v85 = vadd.f32 %v77, %v84
    %86 = vst [vmem:[#allocation7] sm:$0x1] %v85
    // Predicated region
    $region22: #{tpu_custom_call.1} parent=1 // pred_check
      _
    $region23: #{tpu_custom_call.1} parent=1 // pred_check_branch
      %88 = sbr.rel (0) target = $region25
    $region24: #{tpu_custom_call.1} parent=1 // pred_region
      %s90 = ssub.s32 16, 16
      %91 = vsyncadd [#allocation4], %s90
      %s93 = sshll.u32 [#allocation7], 4
      %s94 = int_to_ptr.vmem [resolvable:$true] %s93
      %96 = dma.vmem_to_hbm [thread:$0]  %s94, 16, %s2, [#allocation4]
    $region25: #{tpu_custom_call.1} parent=1 // pred_fallthru
      _
    // Predicated region
    $region26: #{tpu_custom_call.1} parent=1 // pred_check
      _
    $region27: #{tpu_custom_call.1} parent=1 // pred_check_branch
      %98 = sbr.rel (0) target = $region29
    $region28: #{tpu_custom_call.1} parent=1 // pred_region
      %99 = dma.done [#allocation4], 16
    $region29: #{tpu_custom_call.1} parent=1 // pred_fallthru
      _
    %100 = vsyncpa [#allocation3], 1
    %101 = vsyncpa [#allocation6], 1
    %102 = vsyncpa [#allocation4], 1

</llo_original>
